<compile_context>
chip_gen: v6e
topology: v6e:2x2x1
jax: 0.10.0
libtpu: 0.0.40
codegen_flags: <defaults>
</compile_context>

<pallas_src>
import math

import jax
import jax.numpy as jnp
from jax.experimental import pallas as pl
from jax.experimental.pallas import tpu as pltpu


# ---------------------------------------------------------------------------
# Exact (erf-based) GELU, matching PyTorch nn.GELU() default approximate='none'.
# erf via Abramowitz & Stegun 7.1.26 (|abs err| < 1.5e-7); the rational divide is
# done with the EUP approximate reciprocal (frees the VALU slot).
# ---------------------------------------------------------------------------
_ERF_P = 0.3275911
_ERF_A = (0.254829592, -0.284496736, 1.421413741, -1.453152027, 1.061405429)


def _erf_approx(z):
    a1, a2, a3, a4, a5 = _ERF_A
    s = jnp.where(z >= 0.0, 1.0, -1.0)
    za = jnp.abs(z)
    t = pl.reciprocal(1.0 + _ERF_P * za, approx=True)   # EUP, not VALU
    poly = ((((a5 * t + a4) * t + a3) * t + a2) * t + a1) * t
    return s * (1.0 - poly * jnp.exp(-(za * za)))


def _gelu_exact(x):
    return 0.5 * x * (1.0 + _erf_approx(x * (1.0 / math.sqrt(2.0))))


# ---------------------------------------------------------------------------
# Kernel: LayerNorm (affine folded into W1/b1) -> Linear1 -> GELU -> Linear2
# ---------------------------------------------------------------------------
def _make_kernel(use_bf16_matmul: bool, eps: float = 1e-5):
    mdt = jnp.bfloat16 if use_bf16_matmul else jnp.float32

    def kernel(x_ref, w1_ref, b1_ref, w2_ref, b2_ref, o_ref):
        x = x_ref[...]                                    # (T, d_in) f32

        # LayerNorm stats (single pass); gamma/beta are folded into W1/b1.
        mean = jnp.mean(x, axis=-1, keepdims=True)
        msq = jnp.mean(x * x, axis=-1, keepdims=True)
        var = jnp.maximum(msq - mean * mean, 0.0)         # clamp: cancellation safety
        xn = (x - mean) * jax.lax.rsqrt(var + eps)

        # Linear 1 (MXU, f32 accumulation) + exact GELU.
        h = jnp.dot(xn.astype(mdt), w1_ref[...],
                    preferred_element_type=jnp.float32) + b1_ref[...]
        h = _gelu_exact(h)

        # Dropout: inference identity.
        # TODO(synk): training-mode dropout mask not implemented.

        # Linear 2 (MXU, f32 accumulation).
        o_ref[...] = jnp.dot(h.astype(mdt), w2_ref[...],
                             preferred_element_type=jnp.float32) + b2_ref[...]

    return kernel


# ---------------------------------------------------------------------------
# VMEM budgeting / tile selection
# ---------------------------------------------------------------------------
def _vmem_bytes_estimate(tile, d_in, d_h, d_out_p, wbytes):
    io = 2 * tile * d_in * 4 + 2 * tile * d_out_p * 4                   # dbl-buffered x / out
    weights = (d_in * d_h + d_h * d_out_p) * wbytes + (d_h + d_out_p) * 4  # single-buffered
    temps = tile * (2 * d_in + 2 * d_h) * 4                             # xn, h, matmul casts
    return io + weights + temps


def _auto_tile(rows, d_in, d_h, d_out_p, wbytes, block_rows):
    if rows <= block_rows:
        return rows                                        # single full-extent block
    tile = block_rows
    budget = 40 << 20   # conservative: leaves headroom inside v7x's 64 MiB/TC
    while tile > 128 and _vmem_bytes_estimate(tile, d_in, d_h, d_out_p, wbytes) > budget:
        tile //= 2
    return tile


# ---------------------------------------------------------------------------
# Wrapper
# ---------------------------------------------------------------------------
def mlp_head_pallas(x, params, *, block_rows: int = 512, use_bf16_matmul: bool = True,
                    eps: float = 1e-5):
    """x: (..., d_in) f32. params weights are (in, out), i.e. x @ W == x @ W_torch.T."""
    *lead, d_in = x.shape
    rows = math.prod(lead) if lead else 1
    d_h = params["w1"].shape[1]
    d_out = params["w2"].shape[1]
    assert params["w1"].shape == (d_in, d_h)
    assert params["w2"].shape == (d_h, d_out)
    assert block_rows % 8 == 0

    x2 = x.reshape(rows, d_in).astype(jnp.float32)

    # --- Fold the LayerNorm affine into Linear1 (exact algebra, in f32) ---
    gamma = params["gamma"].astype(jnp.float32)
    beta = params["beta"].astype(jnp.float32)
    w1f = params["w1"].astype(jnp.float32)
    w1 = gamma[:, None] * w1f
    b1 = beta @ w1f + params["b1"].astype(jnp.float32)

    # --- Lane-pad the output width to 128 so stores are lane-dense ---
    d_out_p = 128 if d_out < 128 else d_out
    w2 = params["w2"].astype(jnp.float32)
    b2 = params["b2"].astype(jnp.float32)
    if d_out_p != d_out:
        w2 = jnp.pad(w2, ((0, 0), (0, d_out_p - d_out)))
        b2 = jnp.pad(b2, ((0, d_out_p - d_out),))

    # Matmul operand dtype: bf16 on the MXU path (f32 accumulation), f32 otherwise.
    mdt = jnp.bfloat16 if use_bf16_matmul else jnp.float32
    wbytes = 2 if use_bf16_matmul else 4
    w1 = w1.astype(mdt)
    w2 = w2.astype(mdt)
    b1 = b1.reshape(1, d_h)
    b2 = b2.reshape(1, d_out_p)

    # --- Row tiling: largest lane-dense slab that fits the VMEM budget ---
    tile = _auto_tile(rows, d_in, d_h, d_out_p, wbytes, block_rows)
    n_tiles = pl.cdiv(rows, tile)      # ragged last tile handled by Pallas masking
    est = _vmem_bytes_estimate(tile, d_in, d_h, d_out_p, wbytes)
    vmem_limit = int(min(max(32 << 20, 2 * est), 56 << 20))

    kernel = _make_kernel(use_bf16_matmul, eps)

    def const2d(shape):
        # Constant-index operands: single-buffer (they never change across grid steps).
        return pl.BlockSpec(shape, lambda i: (0, 0), pipeline_mode=pl.Buffered(1))

    cost = pl.CostEstimate(
        flops=2 * rows * (d_in * d_h + d_h * d_out_p),
        transcendentals=2 * rows * d_h,   # exp + reciprocal per GELU element
        bytes_accessed=rows * (d_in + d_out_p) * 4
                       + (d_in * d_h + d_h * d_out_p) * wbytes
                       + (d_h + d_out_p) * 4,
    )

    out = pl.pallas_call(
        kernel,
        out_shape=jax.ShapeDtypeStruct((rows, d_out_p), jnp.float32),
        grid=(n_tiles,),
        in_specs=[
            pl.BlockSpec((tile, d_in), lambda i: (i, 0)),   # x rows
            const2d((d_in, d_h)),      # W1 (gamma folded)
            const2d((1, d_h)),         # b1 (beta folded)
            const2d((d_h, d_out_p)),   # W2 (lane-padded)
            const2d((1, d_out_p)),     # b2 (lane-padded)
        ],
        out_specs=pl.BlockSpec((tile, d_out_p), lambda i: (i, 0)),
        compiler_params=pltpu.CompilerParams(
            dimension_semantics=("parallel",),
            vmem_limit_bytes=vmem_limit),
        cost_estimate=cost,
    )(x2, w1, b1, w2, b2)

    if d_out_p != d_out:
        out = out[:, :d_out]
    return out.reshape(*lead, d_out)


# ---------------------------------------------------------------------------
# Pure-JAX reference mirroring the PyTorch forward (eval mode)
# ---------------------------------------------------------------------------
def mlp_head_ref(x, params, eps: float = 1e-5):
    mean = jnp.mean(x, axis=-1, keepdims=True)
    var = jnp.mean((x - mean) ** 2, axis=-1, keepdims=True)
    xn = (x - mean) * jax.lax.rsqrt(var + eps) * params["gamma"] + params["beta"]
    h = xn @ params["w1"] + params["b1"]
    h = jax.nn.gelu(h, approximate=False)      # exact erf GELU == nn.GELU() default
    # Dropout: identity in eval mode.
    return h @ params["w2"] + params["b2"]


def make_params(key, d_in, d_out):
    # Deterministic synthetic parameters (non-trivial, unlike default zero biases).
    d_h = d_in // 2
    ks = jax.random.split(key, 6)
    return {
        "gamma": 1.0 + 0.1 * jax.random.normal(ks[0], (d_in,), jnp.float32),
        "beta": 0.1 * jax.random.normal(ks[1], (d_in,), jnp.float32),
        "w1": 0.1 * jax.random.normal(ks[2], (d_in, d_h), jnp.float32),
        "b1": 0.1 * jax.random.normal(ks[3], (d_h,), jnp.float32),
        "w2": 0.1 * jax.random.normal(ks[4], (d_h, d_out), jnp.float32),
        "b2": 0.1 * jax.random.normal(ks[5], (d_out,), jnp.float32),
    }


if __name__ == "__main__":
    B, N, D_IN, D_OUT = 2, 8, 64, 16   # d_hidden = D_IN // 2 = 32

    key = jax.random.PRNGKey(0)
    kx, kp, kr = jax.random.split(key, 3)
    x = jax.random.normal(kx, (B, N, D_IN), jnp.float32)
    params = make_params(kp, D_IN, D_OUT)

    ref = mlp_head_ref(x, params)

    # Tolerance note: f32-path error is dominated by the approximate EUP reciprocal
    # inside the erf rational approximation (plus the 1.5e-7 erf approx itself).
    TOL = 5e-3

    # 1) f32 MXU path.
    out_f32 = jax.block_until_ready(
        mlp_head_pallas(x, params, use_bf16_matmul=False))
    assert out_f32.shape == (B, N, D_OUT)
    assert jnp.allclose(out_f32, ref, atol=TOL, rtol=TOL), (
        float(jnp.max(jnp.abs(out_f32 - ref))))

    # 2) Multi-tile grid path (block_rows=8 -> 2 grid steps over 16 rows).
    out_tiled = jax.block_until_ready(
        mlp_head_pallas(x, params, block_rows=8, use_bf16_matmul=False))
    assert jnp.allclose(out_tiled, ref, atol=TOL, rtol=TOL), (
        float(jnp.max(jnp.abs(out_tiled - ref))))

    # 3) Ragged row count (rows=15, tile=8 -> partial last block, no jnp.pad copy).
    x_r = jax.random.normal(kr, (3, 5, D_IN), jnp.float32)
    ref_r = mlp_head_ref(x_r, params)
    out_r = jax.block_until_ready(
        mlp_head_pallas(x_r, params, block_rows=8, use_bf16_matmul=False))
    assert out_r.shape == (3, 5, D_OUT)
    assert jnp.allclose(out_r, ref_r, atol=TOL, rtol=TOL), (
        float(jnp.max(jnp.abs(out_r - ref_r))))

    # 4) bf16 MXU inputs with f32 accumulation (perf path) — relaxed tolerance.
    out_bf16 = jax.block_until_ready(
        mlp_head_pallas(x, params, use_bf16_matmul=True))
    assert jnp.allclose(out_bf16, ref, atol=2e-2, rtol=2e-2), (
        float(jnp.max(jnp.abs(out_bf16 - ref))))

    print("KERNEL_OK")
</pallas_src>

<mosaic_0001>
module attributes {stable_mosaic.version = 11 : i64} {
  func.func @kernel(%arg0: i32, %arg1: memref<16x64xf32, #tpu.memory_space<vmem>>, %arg2: memref<64x32xf32, #tpu.memory_space<vmem>>, %arg3: memref<1x32xf32, #tpu.memory_space<vmem>>, %arg4: memref<32x128xf32, #tpu.memory_space<vmem>>, %arg5: memref<1x128xf32, #tpu.memory_space<vmem>>, %arg6: memref<16x128xf32, #tpu.memory_space<vmem>>) attributes {dimension_semantics = [#tpu.dimension_semantics<parallel>], iteration_bounds = array<i64: 1>, scalar_prefetch = 0 : i64, scratch_operands = 0 : i64, tpu.core_type = #tpu.core_type<tc>, window_params = [{transform_indices = @transform_0, window_bounds = array<i64: 16, 64>}, {pipeline_mode = #tpu.pipeline_mode<synchronous>, transform_indices = @transform_1, window_bounds = array<i64: 64, 32>}, {pipeline_mode = #tpu.pipeline_mode<synchronous>, transform_indices = @transform_2, window_bounds = array<i64: 1, 32>}, {pipeline_mode = #tpu.pipeline_mode<synchronous>, transform_indices = @transform_3, window_bounds = array<i64: 32, 128>}, {pipeline_mode = #tpu.pipeline_mode<synchronous>, transform_indices = @transform_4, window_bounds = array<i64: 1, 128>}, {transform_indices = @transform_5, window_bounds = array<i64: 16, 128>}]} {
    %c0 = arith.constant 0 : index
    %c0_0 = arith.constant 0 : index
    %0 = vector.load %arg1[%c0, %c0_0] : memref<16x64xf32, #tpu.memory_space<vmem>>, vector<16x64xf32>
    %cst = arith.constant dense<0.000000e+00> : vector<16xf32>
    %1 = vector.multi_reduction <add>, %0, %cst [1] : vector<16x64xf32> to vector<16xf32>
    %2 = vector.shape_cast %1 : vector<16xf32> to vector<16x1xf32>
    %cst_1 = arith.constant 6.400000e+01 : f32
    %3 = vector.broadcast %cst_1 : f32 to vector<16x1xf32>
    %4 = arith.divf %2, %3 : vector<16x1xf32>
    %5 = arith.mulf %0, %0 : vector<16x64xf32>
    %cst_2 = arith.constant dense<0.000000e+00> : vector<16xf32>
    %6 = vector.multi_reduction <add>, %5, %cst_2 [1] : vector<16x64xf32> to vector<16xf32>
    %7 = vector.shape_cast %6 : vector<16xf32> to vector<16x1xf32>
    %cst_3 = arith.constant 6.400000e+01 : f32
    %8 = vector.broadcast %cst_3 : f32 to vector<16x1xf32>
    %9 = arith.divf %7, %8 : vector<16x1xf32>
    %10 = arith.mulf %4, %4 : vector<16x1xf32>
    %11 = arith.subf %9, %10 : vector<16x1xf32>
    %cst_4 = arith.constant 0.000000e+00 : f32
    %12 = vector.broadcast %cst_4 : f32 to vector<16x1xf32>
    %13 = arith.maximumf %11, %12 : vector<16x1xf32>
    %14 = vector.broadcast %4 : vector<16x1xf32> to vector<16x64xf32>
    %15 = arith.subf %0, %14 : vector<16x64xf32>
    %cst_5 = arith.constant 9.99999974E-6 : f32
    %16 = vector.broadcast %cst_5 : f32 to vector<16x1xf32>
    %17 = arith.addf %13, %16 : vector<16x1xf32>
    %18 = math.rsqrt %17 : vector<16x1xf32>
    %19 = vector.broadcast %18 : vector<16x1xf32> to vector<16x64xf32>
    %20 = arith.mulf %15, %19 : vector<16x64xf32>
    %c0_6 = arith.constant 0 : index
    %c0_7 = arith.constant 0 : index
    %21 = vector.load %arg2[%c0_6, %c0_7] : memref<64x32xf32, #tpu.memory_space<vmem>>, vector<64x32xf32>
    %cst_8 = arith.constant dense<0.000000e+00> : vector<16x32xf32>
    %22 = tpu.matmul %20, %21, %cst_8 {dimension_numbers = #tpu.dot_dimension_numbers<[1], [0], [0], [1], [0, 0, 1, 1], [], []>} : vector<16x64xf32>, vector<64x32xf32>, vector<16x32xf32> -> vector<16x32xf32>
    %c0_9 = arith.constant 0 : index
    %c0_10 = arith.constant 0 : index
    %23 = vector.load %arg3[%c0_9, %c0_10] : memref<1x32xf32, #tpu.memory_space<vmem>>, vector<1x32xf32>
    %24 = vector.broadcast %23 : vector<1x32xf32> to vector<16x32xf32>
    %25 = arith.addf %22, %24 : vector<16x32xf32>
    %cst_11 = arith.constant 5.000000e-01 : f32
    %26 = vector.broadcast %cst_11 : f32 to vector<16x32xf32>
    %27 = arith.mulf %26, %25 : vector<16x32xf32>
    %cst_12 = arith.constant 0.707106769 : f32
    %28 = vector.broadcast %cst_12 : f32 to vector<16x32xf32>
    %29 = arith.mulf %25, %28 : vector<16x32xf32>
    %cst_13 = arith.constant 0.000000e+00 : f32
    %30 = vector.broadcast %cst_13 : f32 to vector<16x32xf32>
    %31 = arith.cmpf oge, %29, %30 : vector<16x32xf32>
    %cst_14 = arith.constant 1.000000e+00 : f32
    %cst_15 = arith.constant -1.000000e+00 : f32
    %32 = vector.broadcast %cst_14 : f32 to vector<16x32xf32>
    %33 = vector.broadcast %cst_15 : f32 to vector<16x32xf32>
    %34 = arith.select %31, %32, %33 : vector<16x32xi1>, vector<16x32xf32>
    %35 = math.absf %29 : vector<16x32xf32>
    %cst_16 = arith.constant 0.327591091 : f32
    %36 = vector.broadcast %cst_16 : f32 to vector<16x32xf32>
    %37 = arith.mulf %36, %35 : vector<16x32xf32>
    %cst_17 = arith.constant 1.000000e+00 : f32
    %38 = vector.broadcast %cst_17 : f32 to vector<16x32xf32>
    %39 = arith.addf %38, %37 : vector<16x32xf32>
    %40 = tpu.reciprocal %39 {approx = true} : vector<16x32xf32> -> vector<16x32xf32>
    %cst_18 = arith.constant 1.06140542 : f32
    %41 = vector.broadcast %cst_18 : f32 to vector<16x32xf32>
    %42 = arith.mulf %41, %40 : vector<16x32xf32>
    %cst_19 = arith.constant -1.45315206 : f32
    %43 = vector.broadcast %cst_19 : f32 to vector<16x32xf32>
    %44 = arith.addf %42, %43 : vector<16x32xf32>
    %45 = arith.mulf %44, %40 : vector<16x32xf32>
    %cst_20 = arith.constant 1.42141378 : f32
    %46 = vector.broadcast %cst_20 : f32 to vector<16x32xf32>
    %47 = arith.addf %45, %46 : vector<16x32xf32>
    %48 = arith.mulf %47, %40 : vector<16x32xf32>
    %cst_21 = arith.constant -0.284496725 : f32
    %49 = vector.broadcast %cst_21 : f32 to vector<16x32xf32>
    %50 = arith.addf %48, %49 : vector<16x32xf32>
    %51 = arith.mulf %50, %40 : vector<16x32xf32>
    %cst_22 = arith.constant 0.254829586 : f32
    %52 = vector.broadcast %cst_22 : f32 to vector<16x32xf32>
    %53 = arith.addf %51, %52 : vector<16x32xf32>
    %54 = arith.mulf %53, %40 : vector<16x32xf32>
    %55 = arith.mulf %35, %35 : vector<16x32xf32>
    %cst_23 = arith.constant 0.000000e+00 : f32
    %56 = vector.broadcast %cst_23 : f32 to vector<16x32xf32>
    %57 = arith.subf %56, %55 : vector<16x32xf32>
    %58 = math.exp %57 : vector<16x32xf32>
    %59 = arith.mulf %54, %58 : vector<16x32xf32>
    %cst_24 = arith.constant 1.000000e+00 : f32
    %60 = vector.broadcast %cst_24 : f32 to vector<16x32xf32>
    %61 = arith.subf %60, %59 : vector<16x32xf32>
    %62 = arith.mulf %34, %61 : vector<16x32xf32>
    %cst_25 = arith.constant 1.000000e+00 : f32
    %63 = vector.broadcast %cst_25 : f32 to vector<16x32xf32>
    %64 = arith.addf %63, %62 : vector<16x32xf32>
    %65 = arith.mulf %27, %64 : vector<16x32xf32>
    %c0_26 = arith.constant 0 : index
    %c0_27 = arith.constant 0 : index
    %66 = vector.load %arg4[%c0_26, %c0_27] : memref<32x128xf32, #tpu.memory_space<vmem>>, vector<32x128xf32>
    %cst_28 = arith.constant dense<0.000000e+00> : vector<16x128xf32>
    %67 = tpu.matmul %65, %66, %cst_28 {dimension_numbers = #tpu.dot_dimension_numbers<[1], [0], [0], [1], [0, 0, 1, 1], [], []>} : vector<16x32xf32>, vector<32x128xf32>, vector<16x128xf32> -> vector<16x128xf32>
    %c0_29 = arith.constant 0 : index
    %c0_30 = arith.constant 0 : index
    %68 = vector.load %arg5[%c0_29, %c0_30] : memref<1x128xf32, #tpu.memory_space<vmem>>, vector<1x128xf32>
    %69 = vector.broadcast %68 : vector<1x128xf32> to vector<16x128xf32>
    %70 = arith.addf %67, %69 : vector<16x128xf32>
    %c0_31 = arith.constant 0 : index
    %c0_32 = arith.constant 0 : index
    %71 = vector.load %arg6[%c0_31, %c0_32] : memref<16x128xf32, #tpu.memory_space<vmem>>, vector<16x128xf32>
    tpu.vector_store %arg6[%c0_31, %c0_32], %70 {strides = array<i32>} : memref<16x128xf32, #tpu.memory_space<vmem>>, vector<16x128xf32>,
    return
  }
  func.func @transform_0(%arg0: i32) -> (i32, i32) {
    %c0_i32 = arith.constant 0 : i32
    %c0_i32_0 = arith.constant 0 : i32
    return %arg0, %c0_i32 : i32, i32
  }
  func.func @transform_1(%arg0: i32) -> (i32, i32) {
    %c0_i32 = arith.constant 0 : i32
    %c0_i32_0 = arith.constant 0 : i32
    %c0_i32_1 = arith.constant 0 : i32
    return %c0_i32, %c0_i32_0 : i32, i32
  }
  func.func @transform_2(%arg0: i32) -> (i32, i32) {
    %c0_i32 = arith.constant 0 : i32
    %c0_i32_0 = arith.constant 0 : i32
    %c0_i32_1 = arith.constant 0 : i32
    return %c0_i32, %c0_i32_0 : i32, i32
  }
  func.func @transform_3(%arg0: i32) -> (i32, i32) {
    %c0_i32 = arith.constant 0 : i32
    %c0_i32_0 = arith.constant 0 : i32
    %c0_i32_1 = arith.constant 0 : i32
    return %c0_i32, %c0_i32_0 : i32, i32
  }
  func.func @transform_4(%arg0: i32) -> (i32, i32) {
    %c0_i32 = arith.constant 0 : i32
    %c0_i32_0 = arith.constant 0 : i32
    %c0_i32_1 = arith.constant 0 : i32
    return %c0_i32, %c0_i32_0 : i32, i32
  }
  func.func @transform_5(%arg0: i32) -> (i32, i32) {
    %c0_i32 = arith.constant 0 : i32
    %c0_i32_0 = arith.constant 0 : i32
    return %arg0, %c0_i32 : i32, i32
  }
}

</mosaic_0001>

<llo_original>
// kernel: tpu_custom_call.1
$region0: #{tpu_custom_call.1}
  #allocation0 [shape = 'u32[]', space=smem, size = 0x4, offset = 0x4, fixed_abs, tag = 'smem constant byte address 0x4 - core index']
  #allocation1 [shape = 'u32[144,128]{1,0:T(1,128)}', space=vmem, size = 0x12000, scoped, tag = 'internal scratch']
  %s0 = inlined_call_operand.vmem [shape: f32[16,64], index: 0, kind: input, shape index: {}]
  %s1 = inlined_call_operand.vmem [shape: f32[64,32], index: 1, kind: input, shape index: {}]
  %s2 = inlined_call_operand.vmem [shape: f32[1,32], index: 2, kind: input, shape index: {}]
  %s3 = inlined_call_operand.vmem [shape: f32[32,128], index: 3, kind: input, shape index: {}]
  %s4 = inlined_call_operand.vmem [shape: f32[1,128], index: 4, kind: input, shape index: {}]
  %s5 = inlined_call_operand.hbm [shape: f32[16,128], index: 5, kind: output, shape index: {}]
  %s6 = sld [smem:[#allocation0]]
  $region30: #{tpu_custom_call.1} parent=0
    _
  %s8 = ssub.s32 1, %s6
  %s9 = scalar_select 0, %s8, %s6
  $region1: #{tpu_custom_call.1} parent=0
    #allocation2 [shape = 'u8[8192]{0}', space=vmem, size = 0x2000, scoped, tag = 'output window, operand 0, single buffered']
    #allocation3 [shape = 's32[1]{0}', space=sflag, size = 0x4, scoped, tag = 'scoped memory for tpu_custom_call.1']
    %10 = vsyncpa [#allocation3], 0
    // Predicated region
    $region2: #{tpu_custom_call.1} parent=1 // pred_check
      _
    $region3: #{tpu_custom_call.1} parent=1 // pred_check_branch
      %12 = sbr.rel (0) target = $region5
    $region4: #{tpu_custom_call.1} parent=1 // pred_region
      _
    $region5: #{tpu_custom_call.1} parent=1 // pred_fallthru
      _
    // Predicated region
    $region6: #{tpu_custom_call.1} parent=1 // pred_check
      _
    $region7: #{tpu_custom_call.1} parent=1 // pred_check_branch
      %14 = sbr.rel (0) target = $region9
    $region8: #{tpu_custom_call.1} parent=1 // pred_region
      _
    $region9: #{tpu_custom_call.1} parent=1 // pred_fallthru
      _
    // Predicated region
    $region10: #{tpu_custom_call.1} parent=1 // pred_check
      _
    $region11: #{tpu_custom_call.1} parent=1 // pred_check_branch
      %16 = sbr.rel (0) target = $region13
    $region12: #{tpu_custom_call.1} parent=1 // pred_region
      _
    $region13: #{tpu_custom_call.1} parent=1 // pred_fallthru
      _
    // Predicated region
    $region14: #{tpu_custom_call.1} parent=1 // pred_check
      _
    $region15: #{tpu_custom_call.1} parent=1 // pred_check_branch
      %18 = sbr.rel (0) target = $region17
    $region16: #{tpu_custom_call.1} parent=1 // pred_region
      _
    $region17: #{tpu_custom_call.1} parent=1 // pred_fallthru
      _
    // Predicated region
    $region18: #{tpu_custom_call.1} parent=1 // pred_check
      _
    $region19: #{tpu_custom_call.1} parent=1 // pred_check_branch
      %20 = sbr.rel (0) target = $region21
    $region20: #{tpu_custom_call.1} parent=1 // pred_region
      _
    $region21: #{tpu_custom_call.1} parent=1 // pred_fallthru
      _
    %v21 = vld [vmem:[%s0] sm:$0xff]
    %v22 = vld [vmem:[%s0 + $0x8] sm:$0xff]
    %vm23 = vcmask 523264
    %v24 = vsel %vm23, %v21, 0.0
    %25 = vadd.xlane.f32.xlu0 %v24
    %v26 = vpop.xlane.xlu0 %25
    %v27 = vsel %vm23, %v22, 0.0
    %28 = vadd.xlane.f32.xlu0 %v27
    %v29 = vpop.xlane.xlu0 %28
    %v30 = vrcp.pop 64.0
    %v31 = vmul.f32 %v26, %v30
    %v32 = vmul.f32 %v29, %v30
    %v33 = vmul.f32 %v21, %v21
    %v34 = vmul.f32 %v22, %v22
    %v35 = vsel %vm23, %v33, 0.0
    %36 = vadd.xlane.f32.xlu0 %v35
    %v37 = vpop.xlane.xlu0 %36
    %v38 = vsel %vm23, %v34, 0.0
    %39 = vadd.xlane.f32.xlu0 %v38
    %v40 = vpop.xlane.xlu0 %39
    %v41 = vmul.f32 %v37, %v30
    %v42 = vmul.f32 %v40, %v30
    %v43 = vmul.f32 %v31, %v31
    %v44 = vmul.f32 %v32, %v32
    %v45 = vsub.f32 %v41, %v43
    %v46 = vsub.f32 %v42, %v44
    %v47 = vmax.f32 %v45, 0.0
    %v48 = vmax.f32 %v46, 0.0
    %v49 = vsub.f32 %v21, %v31
    %v50 = vsub.f32 %v22, %v32
    %v51 = vadd.f32 %v47, 1e-05
    %v52 = vadd.f32 %v48, 1e-05
    %v53 = vrsqrt.pop %v51
    %v54 = vrsqrt.pop %v52
    %v55 = vmul.f32 %v49, %v53
    %v56 = vmul.f32 %v50, %v54
    %v57 = vld [vmem:[%s1] sm:$0xff]
    %v58 = vld [vmem:[%s1 + $0x8] sm:$0xff]
    %v59 = vld [vmem:[%s1 + $0x10] sm:$0xff]
    %v60 = vld [vmem:[%s1 + $0x18] sm:$0xff]
    %v61 = vld [vmem:[%s1 + $0x20] sm:$0xff]
    %v62 = vld [vmem:[%s1 + $0x28] sm:$0xff]
    %v63 = vld [vmem:[%s1 + $0x30] sm:$0xff]
    %v64 = vld [vmem:[%s1 + $0x38] sm:$0xff]
    %v65 = vld [vmem:[%s2] sm:$0x1]
    %v67 = vlaneseq
    %v68 = vshrl.u32 %v67, 7
    %v69 = vsub.s32 0, %v68
    %v70 = vrot.slane %v65, %v69
    %v73 = vsel %vm23, %v55, 0
    %v76 = vsel %vm23, %v56, 0
    %78 = vmatprep.subr.mxu0 0.0
    %79 = vmatpush1.msra.mxu0 0.0
    %80 = vmatprep.subr.mxu0 0.0
    %81 = vmatpush1.msra.mxu0 0.0
    %82 = vmatprep.subr.mxu0 0.0
    %83 = vmatpush1.msra.mxu0 0.0
    %84 = vmatprep.subr.mxu0 0.0
    %85 = vmatpush1.msra.mxu0 0.0
    %86 = vmatprep.subr.mxu0 0.0
    %87 = vmatpush1.msra.mxu0 0.0
    %88 = vmatprep.subr.mxu0 0.0
    %89 = vmatpush1.msra.mxu0 0.0
    %90 = vmatprep.subr.mxu0 0.0
    %91 = vmatpush1.msra.mxu0 0.0
    %92 = vmatprep.subr.mxu0 0.0
    %93 = vmatpush1.msra.mxu0 0.0
    %94 = vmatprep.subr.mxu0 0.0
    %95 = vmatpush1.msra.mxu0 %v64
    %96 = vmatprep.subr.mxu0 0.0
    %97 = vmatpush1.msra.mxu0 %v63
    %98 = vmatprep.subr.mxu0 0.0
    %99 = vmatpush1.msra.mxu0 %v62
    %100 = vmatprep.subr.mxu0 0.0
    %101 = vmatpush1.msra.mxu0 %v61
    %102 = vmatprep.subr.mxu0 0.0
    %103 = vmatpush1.msra.mxu0 %v60
    %104 = vmatprep.subr.mxu0 0.0
    %105 = vmatpush1.msra.mxu0 %v59
    %106 = vmatprep.subr.mxu0 0.0
    %107 = vmatpush1.msra.mxu0 %v58
    %108 = vmatprep.subr.mxu0 0.0
    %109 = vmatpush1.msra.mxu0 %v57
    %110 = vmatprep.subr.mxu0 0.0
    %111 = vmatpush2.msra.mxu0 0.0
    %112 = vmatprep.subr.mxu0 0.0
    %113 = vmatpush2.msra.mxu0 0.0
    %114 = vmatprep.subr.mxu0 0.0
    %115 = vmatpush2.msra.mxu0 0.0
    %116 = vmatprep.subr.mxu0 0.0
    %117 = vmatpush2.msra.mxu0 0.0
    %118 = vmatprep.subr.mxu0 0.0
    %119 = vmatpush2.msra.mxu0 0.0
    %120 = vmatprep.subr.mxu0 0.0
    %121 = vmatpush2.msra.mxu0 0.0
    %122 = vmatprep.subr.mxu0 0.0
    %123 = vmatpush2.msra.mxu0 0.0
    %124 = vmatprep.subr.mxu0 0.0
    %125 = vmatpush2.msra.mxu0 0.0
    %126 = vmatprep.subr.mxu0 0.0
    %127 = vmatpush2.msra.mxu0 0.0
    %128 = vmatprep.subr.mxu0 0.0
    %129 = vmatpush2.msra.mxu0 0.0
    %130 = vmatprep.subr.mxu0 0.0
    %131 = vmatpush2.msra.mxu0 0.0
    %132 = vmatprep.subr.mxu0 0.0
    %133 = vmatpush2.msra.mxu0 0.0
    %134 = vmatprep.subr.mxu0 0.0
    %135 = vmatpush2.msra.mxu0 0.0
    %136 = vmatprep.subr.mxu0 0.0
    %137 = vmatpush2.msra.mxu0 0.0
    %138 = vmatprep.subr.mxu0 0.0
    %139 = vmatpush2.msra.mxu0 0.0
    %140 = vmatprep.subr.mxu0 0.0
    %141 = vmatpush2.msra.mxu0 0.0
    %142 = vmatprep.mubr.f32.mxu0 0.0
    %143 = vmatmul.mubr.f32.gmra.mxu0 %v73
    %v144 = vpop.f32.mrf.mxu0
    %v145 = vadd.f32 %v70, %v144
    %v146 = vpop.f32.mrf.mxu0
    %147 = vmatprep.mubr.f32.mxu0 0.0
    %148 = vmatmul.mubr.f32.gmra.mxu0 %v76
    %v149 = vpop.f32.mrf.mxu0
    %v150 = vadd.f32 %v70, %v149
    %v151 = vpop.f32.mrf.mxu0
    %152 = vdwg.mxu0
    %v153 = vmul.f32 %v145, 0.5
    %v154 = vmul.f32 %v150, 0.5
    %v155 = vmul.f32 %v145, 0.70710677
    %v156 = vmul.f32 %v150, 0.70710677
    %vm157 = vcmp.ge.f32.partialorder %v155, 0.0
    %vm158 = vcmp.ge.f32.partialorder %v156, 0.0
    %v159 = vsel %vm157, 1.0, -1.0
    %v160 = vsel %vm158, 1.0, -1.0
    %v161 = vand.u32 2147483647, %v155
    %v162 = vand.u32 2147483647, %v156
    %v163 = vmul.f32 %v161, 0.3275911
    %v164 = vmul.f32 %v162, 0.3275911
    %v165 = vadd.f32 %v163, 1.0
    %v166 = vadd.f32 %v164, 1.0
    %v167 = vrcp.pop %v165
    %v168 = vrcp.pop %v166
    %v169 = vmul.f32 %v167, 1.0614054
    %v170 = vmul.f32 %v168, 1.0614054
    %v171 = vadd.f32 %v169, -1.4531521
    %v172 = vadd.f32 %v170, -1.4531521
    %v173 = vmul.f32 %v171, %v167
    %v174 = vmul.f32 %v172, %v168
    %v175 = vadd.f32 %v173, 1.4214138
    %v176 = vadd.f32 %v174, 1.4214138
    %v177 = vmul.f32 %v175, %v167
    %v178 = vmul.f32 %v176, %v168
    %v179 = vadd.f32 %v177, -0.28449672
    %v180 = vadd.f32 %v178, -0.28449672
    %v181 = vmul.f32 %v179, %v167
    %v182 = vmul.f32 %v180, %v168
    %v183 = vadd.f32 %v181, 0.2548296
    %v184 = vadd.f32 %v182, 0.2548296
    %v185 = vmul.f32 %v183, %v167
    %v186 = vmul.f32 %v184, %v168
    %v187 = vmul.f32 %v161, %v161
    %v188 = vmul.f32 %v162, %v162
    %v189 = vsub.f32 0.0, %v187
    %v190 = vsub.f32 0.0, %v188
    %v191 = vmul.f32 %v189, 1.442695
    %v192 = vpow.pop %v191
    %v193 = vmul.f32 %v190, 1.442695
    %v194 = vpow.pop %v193
    %v195 = vmul.f32 %v185, %v192
    %v196 = vmul.f32 %v186, %v194
    %v197 = vsub.f32 1.0, %v195
    %v198 = vsub.f32 1.0, %v196
    %v199 = vmul.f32 %v159, %v197
    %v200 = vmul.f32 %v160, %v198
    %v201 = vadd.f32 %v199, 1.0
    %v202 = vadd.f32 %v200, 1.0
    %v203 = vmul.f32 %v153, %v201
    %v204 = vmul.f32 %v154, %v202
    %v205 = vld [vmem:[%s3] sm:$0xff]
    %v206 = vld [vmem:[%s3 + $0x8] sm:$0xff]
    %v207 = vld [vmem:[%s3 + $0x10] sm:$0xff]
    %v208 = vld [vmem:[%s3 + $0x18] sm:$0xff]
    %v209 = vld [vmem:[%s4] sm:$0x1]
    %v211 = vlaneseq
    %v212 = vshrl.u32 %v211, 7
    %v213 = vsub.s32 0, %v212
    %v214 = vrot.slane %v209, %v213
    %vm216 = vcmask 261120
    %v218 = vsel %vm216, %v203, 0
    %v221 = vsel %vm216, %v204, 0
    %223 = vmatprep.subr.mxu0 0.0
    %224 = vmatpush1.msra.mxu0 0.0
    %225 = vmatprep.subr.mxu0 0.0
    %226 = vmatpush1.msra.mxu0 0.0
    %227 = vmatprep.subr.mxu0 0.0
    %228 = vmatpush1.msra.mxu0 0.0
    %229 = vmatprep.subr.mxu0 0.0
    %230 = vmatpush1.msra.mxu0 0.0
    %231 = vmatprep.subr.mxu0 0.0
    %232 = vmatpush1.msra.mxu0 0.0
    %233 = vmatprep.subr.mxu0 0.0
    %234 = vmatpush1.msra.mxu0 0.0
    %235 = vmatprep.subr.mxu0 0.0
    %236 = vmatpush1.msra.mxu0 0.0
    %237 = vmatprep.subr.mxu0 0.0
    %238 = vmatpush1.msra.mxu0 0.0
    %239 = vmatprep.subr.mxu0 0.0
    %240 = vmatpush1.msra.mxu0 0.0
    %241 = vmatprep.subr.mxu0 0.0
    %242 = vmatpush1.msra.mxu0 0.0
    %243 = vmatprep.subr.mxu0 0.0
    %244 = vmatpush1.msra.mxu0 0.0
    %245 = vmatprep.subr.mxu0 0.0
    %246 = vmatpush1.msra.mxu0 0.0
    %247 = vmatprep.subr.mxu0 0.0
    %248 = vmatpush1.msra.mxu0 %v208
    %249 = vmatprep.subr.mxu0 0.0
    %250 = vmatpush1.msra.mxu0 %v207
    %251 = vmatprep.subr.mxu0 0.0
    %252 = vmatpush1.msra.mxu0 %v206
    %253 = vmatprep.subr.mxu0 0.0
    %254 = vmatpush1.msra.mxu0 %v205
    %255 = vmatprep.subr.mxu0 0.0
    %256 = vmatpush2.msra.mxu0 0.0
    %257 = vmatprep.subr.mxu0 0.0
    %258 = vmatpush2.msra.mxu0 0.0
    %259 = vmatprep.subr.mxu0 0.0
    %260 = vmatpush2.msra.mxu0 0.0
    %261 = vmatprep.subr.mxu0 0.0
    %262 = vmatpush2.msra.mxu0 0.0
    %263 = vmatprep.subr.mxu0 0.0
    %264 = vmatpush2.msra.mxu0 0.0
    %265 = vmatprep.subr.mxu0 0.0
    %266 = vmatpush2.msra.mxu0 0.0
    %267 = vmatprep.subr.mxu0 0.0
    %268 = vmatpush2.msra.mxu0 0.0
    %269 = vmatprep.subr.mxu0 0.0
    %270 = vmatpush2.msra.mxu0 0.0
    %271 = vmatprep.subr.mxu0 0.0
    %272 = vmatpush2.msra.mxu0 0.0
    %273 = vmatprep.subr.mxu0 0.0
    %274 = vmatpush2.msra.mxu0 0.0
    %275 = vmatprep.subr.mxu0 0.0
    %276 = vmatpush2.msra.mxu0 0.0
    %277 = vmatprep.subr.mxu0 0.0
    %278 = vmatpush2.msra.mxu0 0.0
    %279 = vmatprep.subr.mxu0 0.0
    %280 = vmatpush2.msra.mxu0 0.0
    %281 = vmatprep.subr.mxu0 0.0
    %282 = vmatpush2.msra.mxu0 0.0
    %283 = vmatprep.subr.mxu0 0.0
    %284 = vmatpush2.msra.mxu0 0.0
    %285 = vmatprep.subr.mxu0 0.0
    %286 = vmatpush2.msra.mxu0 0.0
    %287 = vmatprep.mubr.f32.mxu0 0.0
    %288 = vmatmul.mubr.f32.gmra.mxu0 %v218
    %v289 = vpop.f32.mrf.mxu0
    %v290 = vadd.f32 %v214, %v289
    %v291 = vpop.f32.mrf.mxu0
    %292 = vmatprep.mubr.f32.mxu0 0.0
    %293 = vmatmul.mubr.f32.gmra.mxu0 %v221
    %v294 = vpop.f32.mrf.mxu0
    %v295 = vadd.f32 %v214, %v294
    %v296 = vpop.f32.mrf.mxu0
    %297 = vdwg.mxu0
    %298 = vst [vmem:[#allocation2] sm:$0xff] %v290
    %299 = vst [vmem:[#allocation2 + $0x8] sm:$0xff] %v295
    // Predicated region
    $region22: #{tpu_custom_call.1} parent=1 // pred_check
      _
    $region23: #{tpu_custom_call.1} parent=1 // pred_check_branch
      %301 = sbr.rel (0) target = $region25
    $region24: #{tpu_custom_call.1} parent=1 // pred_region
      %s303 = ssub.s32 256, 256
      %304 = vsyncadd [#allocation3], %s303
      %s305 = sshll.u32 [#allocation2], 4
      %s306 = int_to_ptr.vmem [resolvable:$true] %s305
      %311 = dma.vmem_to_hbm [thread:$0]  %s306, 256, %s5, [#allocation3], 128, 128, 8
    $region25: #{tpu_custom_call.1} parent=1 // pred_fallthru
      _
    // Predicated region
    $region26: #{tpu_custom_call.1} parent=1 // pred_check
      _
    $region27: #{tpu_custom_call.1} parent=1 // pred_check_branch
      %313 = sbr.rel (0) target = $region29
    $region28: #{tpu_custom_call.1} parent=1 // pred_region
      %314 = dma.done [#allocation3], 256
    $region29: #{tpu_custom_call.1} parent=1 // pred_fallthru
      _
    %315 = vsyncpa [#allocation3], 1

</llo_original>
